<compile_context>
chip_gen: v6e
topology: v6e:2x2x1
jax: 0.10.0
libtpu: 0.0.40
codegen_flags: <defaults>
</compile_context>

<pallas_src>
import functools

import jax
import jax.numpy as jnp
from jax import lax
from jax.experimental import pallas as pl
from jax.experimental.pallas import tpu as pltpu

N_EMBD = 384        # module global n_embd
BLOCK_SIZE = 256    # module global block_size (max sequence length)
DROPOUT_P = 0.2     # module global dropout


def head_kernel(x_ref, wk_ref, wq_ref, wv_ref, u_ref, o_ref, *, dropout_p):
    T, C = x_ref.shape

    xb = x_ref[...].astype(jnp.bfloat16)                                  # (T, C)

    # QKV projections (MXU, bf16 operands, f32 accumulation).
    k = jnp.dot(xb, wk_ref[...], preferred_element_type=jnp.float32)     # (T, hs)
    q = jnp.dot(xb, wq_ref[...], preferred_element_type=jnp.float32)     # (T, hs)
    v = jnp.dot(xb, wv_ref[...], preferred_element_type=jnp.float32)     # (T, hs)

    # Scaled attention scores; the reference module scales by C**-0.5 (n_embd).
    scores = jnp.dot(q.astype(jnp.bfloat16), k.astype(jnp.bfloat16).T,
                     preferred_element_type=jnp.float32) * (C ** -0.5)   # (T, T)

    # Causal (tril) mask: query t attends to keys <= t.
    row = lax.broadcasted_iota(jnp.int32, (T, T), 0)
    col = lax.broadcasted_iota(jnp.int32, (T, T), 1)
    scores = jnp.where(row >= col, scores, -jnp.inf)

    # Numerically-stable softmax along the key axis (f32).
    m = jnp.max(scores, axis=-1, keepdims=True)
    p = jnp.exp(scores - m)
    w = p / jnp.sum(p, axis=-1, keepdims=True)

    # Dropout on the attention weights (training semantics): drop with prob p,
    # scale survivors by 1/(1-p), using the precomputed uniform randoms.
    keep = u_ref[...] >= dropout_p
    w = jnp.where(keep, w * (1.0 / (1.0 - dropout_p)), 0.0)

    # Weighted sum of values.
    out = jnp.dot(w.astype(jnp.bfloat16), v.astype(jnp.bfloat16),
                  preferred_element_type=jnp.float32)                    # (T, hs)
    o_ref[...] = out.astype(o_ref.dtype)


def head_forward(x, wk, wq, wv, dropout_u, *, dropout_p=DROPOUT_P):
    """Fused attention head.

    x:          (B, T, C) activations, C = n_embd.
    wk/wq/wv:   (C, head_size) — transpose of PyTorch nn.Linear weight (no bias),
                so the projection is plain `x @ W`.
    dropout_u:  (B, T, T) uniform [0,1) randoms for the dropout mask.
    """
    B, T, C = x.shape
    hs = wk.shape[1]
    assert T <= BLOCK_SIZE and T % 8 == 0 and C % 128 == 0

    # bf16 projection weights: half the HBM traffic / VMEM for the resident
    # (grid-invariant) matrices; accumulation stays f32 inside the kernel.
    wk_b = wk.astype(jnp.bfloat16)
    wq_b = wq.astype(jnp.bfloat16)
    wv_b = wv.astype(jnp.bfloat16)

    flops = B * (3 * 2 * T * C * hs + 2 * 2 * T * T * hs)
    bytes_accessed = (x.size * x.dtype.itemsize          # activations
                      + 3 * C * hs * 2                   # bf16 weights
                      + dropout_u.size * 4               # dropout randoms
                      + B * T * hs * x.dtype.itemsize)   # output

    out = pl.pallas_call(
        functools.partial(head_kernel, dropout_p=dropout_p),
        out_shape=jax.ShapeDtypeStruct((B, T, hs), x.dtype),
        grid=(B,),
        in_specs=[
            pl.BlockSpec((None, T, C), lambda b: (b, 0, 0)),   # x, one batch row
            pl.BlockSpec((C, hs), lambda b: (0, 0)),           # Wk (grid-invariant)
            pl.BlockSpec((C, hs), lambda b: (0, 0)),           # Wq
            pl.BlockSpec((C, hs), lambda b: (0, 0)),           # Wv
            pl.BlockSpec((None, T, T), lambda b: (b, 0, 0)),   # dropout randoms
        ],
        out_specs=pl.BlockSpec((None, T, hs), lambda b: (b, 0, 0)),
        compiler_params=pltpu.CompilerParams(
            dimension_semantics=("parallel",),   # independent batch rows
        ),
        cost_estimate=pl.CostEstimate(
            flops=flops,
            transcendentals=B * T * T,
            bytes_accessed=bytes_accessed,
        ),
    )(x, wk_b, wq_b, wv_b, dropout_u)
    return out


if __name__ == "__main__":
    key = jax.random.PRNGKey(0)
    kx, kk, kq, kv, kd = jax.random.split(key, 5)

    B, T, C = 2, 8, N_EMBD
    head_size = 64

    x = jax.random.normal(kx, (B, T, C), dtype=jnp.float32)
    # Weights stored as (in, out): transpose of nn.Linear(n_embd, head_size).weight.
    wk = jax.random.normal(kk, (C, head_size), dtype=jnp.float32) * 0.02
    wq = jax.random.normal(kq, (C, head_size), dtype=jnp.float32) * 0.02
    wv = jax.random.normal(kv, (C, head_size), dtype=jnp.float32) * 0.02
    u = jax.random.uniform(kd, (B, T, T), dtype=jnp.float32)

    y = head_forward(x, wk, wq, wv, u)
    jax.block_until_ready(y)
    assert y.shape == (B, T, head_size) and y.dtype == x.dtype

    # Pure-JAX f32 reference of the module forward, using the same dropout randoms.
    k_ = x @ wk
    q_ = x @ wq
    v_ = x @ wv
    scores = (q_ @ jnp.swapaxes(k_, -2, -1)) * (C ** -0.5)
    causal = jnp.tril(jnp.ones((T, T), dtype=bool))
    scores = jnp.where(causal, scores, -jnp.inf)
    w = jax.nn.softmax(scores, axis=-1)
    w = jnp.where(u >= DROPOUT_P, w / (1.0 - DROPOUT_P), 0.0)
    ref = w @ v_

    assert jnp.allclose(y, ref, atol=2e-2, rtol=2e-2), (
        "max abs err = %f" % float(jnp.max(jnp.abs(y - ref))))

    print("KERNEL_OK")
</pallas_src>

<mosaic_0001>
module attributes {stable_mosaic.version = 11 : i64} {
  func.func @head_kernel(%arg0: i32, %arg1: memref<1x8x384xf32, #tpu.memory_space<vmem>>, %arg2: memref<384x64xbf16, #tpu.memory_space<vmem>>, %arg3: memref<384x64xbf16, #tpu.memory_space<vmem>>, %arg4: memref<384x64xbf16, #tpu.memory_space<vmem>>, %arg5: memref<1x8x8xf32, #tpu.memory_space<vmem>>, %arg6: memref<1x8x64xf32, #tpu.memory_space<vmem>>) attributes {dimension_semantics = [#tpu.dimension_semantics<parallel>], iteration_bounds = array<i64: 2>, scalar_prefetch = 0 : i64, scratch_operands = 0 : i64, tpu.core_type = #tpu.core_type<tc>, window_params = [{transform_indices = @transform_0, window_bounds = array<i64: 1, 8, 384>}, {pipeline_mode = #tpu.pipeline_mode<synchronous>, transform_indices = @transform_1, window_bounds = array<i64: 384, 64>}, {pipeline_mode = #tpu.pipeline_mode<synchronous>, transform_indices = @transform_2, window_bounds = array<i64: 384, 64>}, {pipeline_mode = #tpu.pipeline_mode<synchronous>, transform_indices = @transform_3, window_bounds = array<i64: 384, 64>}, {transform_indices = @transform_4, window_bounds = array<i64: 1, 8, 8>}, {transform_indices = @transform_5, window_bounds = array<i64: 1, 8, 64>}]} {
    %c0 = arith.constant 0 : index
    %c0_0 = arith.constant 0 : index
    %c0_1 = arith.constant 0 : index
    %0 = vector.load %arg1[%c0, %c0_0, %c0_1] : memref<1x8x384xf32, #tpu.memory_space<vmem>>, vector<1x8x384xf32>
    %1 = vector.shape_cast %0 : vector<1x8x384xf32> to vector<8x384xf32>
    %2 = arith.truncf %1 : vector<8x384xf32> to vector<8x384xbf16>
    %c0_2 = arith.constant 0 : index
    %c0_3 = arith.constant 0 : index
    %3 = vector.load %arg2[%c0_2, %c0_3] : memref<384x64xbf16, #tpu.memory_space<vmem>>, vector<384x64xbf16>
    %cst = arith.constant dense<0.000000e+00> : vector<8x64xf32>
    %4 = tpu.matmul %2, %3, %cst {dimension_numbers = #tpu.dot_dimension_numbers<[1], [0], [0], [1], [0, 0, 1, 1], [], []>} : vector<8x384xbf16>, vector<384x64xbf16>, vector<8x64xf32> -> vector<8x64xf32>
    %c0_4 = arith.constant 0 : index
    %c0_5 = arith.constant 0 : index
    %5 = vector.load %arg3[%c0_4, %c0_5] : memref<384x64xbf16, #tpu.memory_space<vmem>>, vector<384x64xbf16>
    %cst_6 = arith.constant dense<0.000000e+00> : vector<8x64xf32>
    %6 = tpu.matmul %2, %5, %cst_6 {dimension_numbers = #tpu.dot_dimension_numbers<[1], [0], [0], [1], [0, 0, 1, 1], [], []>} : vector<8x384xbf16>, vector<384x64xbf16>, vector<8x64xf32> -> vector<8x64xf32>
    %c0_7 = arith.constant 0 : index
    %c0_8 = arith.constant 0 : index
    %7 = vector.load %arg4[%c0_7, %c0_8] : memref<384x64xbf16, #tpu.memory_space<vmem>>, vector<384x64xbf16>
    %cst_9 = arith.constant dense<0.000000e+00> : vector<8x64xf32>
    %8 = tpu.matmul %2, %7, %cst_9 {dimension_numbers = #tpu.dot_dimension_numbers<[1], [0], [0], [1], [0, 0, 1, 1], [], []>} : vector<8x384xbf16>, vector<384x64xbf16>, vector<8x64xf32> -> vector<8x64xf32>
    %9 = arith.truncf %6 : vector<8x64xf32> to vector<8x64xbf16>
    %10 = arith.truncf %4 : vector<8x64xf32> to vector<8x64xbf16>
    %11 = tpu.transpose %10, [1, 0] : vector<8x64xbf16> -> vector<64x8xbf16>
    %cst_10 = arith.constant dense<0.000000e+00> : vector<8x8xf32>
    %12 = tpu.matmul %9, %11, %cst_10 {dimension_numbers = #tpu.dot_dimension_numbers<[1], [0], [0], [1], [0, 0, 1, 1], [], []>} : vector<8x64xbf16>, vector<64x8xbf16>, vector<8x8xf32> -> vector<8x8xf32>
    %cst_11 = arith.constant 0.0510310382 : f32
    %13 = vector.broadcast %cst_11 : f32 to vector<8x8xf32>
    %14 = arith.mulf %12, %13 : vector<8x8xf32>
    %15 = tpu.iota {dimensions = array<i32: 0>} : vector<8x8xi32>
    %16 = tpu.iota {dimensions = array<i32: 1>} : vector<8x8xi32>
    %17 = arith.cmpi sge, %15, %16 : vector<8x8xi32>
    %cst_12 = arith.constant 0xFF800000 : f32
    %18 = vector.broadcast %cst_12 : f32 to vector<8x8xf32>
    %19 = arith.select %17, %14, %18 : vector<8x8xi1>, vector<8x8xf32>
    %cst_13 = arith.constant dense<0xFF800000> : vector<8xf32>
    %20 = vector.multi_reduction <maximumf>, %19, %cst_13 [1] : vector<8x8xf32> to vector<8xf32>
    %21 = vector.shape_cast %20 : vector<8xf32> to vector<8x1xf32>
    %22 = vector.broadcast %21 : vector<8x1xf32> to vector<8x8xf32>
    %23 = arith.subf %19, %22 : vector<8x8xf32>
    %24 = math.exp %23 : vector<8x8xf32>
    %cst_14 = arith.constant dense<0.000000e+00> : vector<8xf32>
    %25 = vector.multi_reduction <add>, %24, %cst_14 [1] : vector<8x8xf32> to vector<8xf32>
    %26 = vector.shape_cast %25 : vector<8xf32> to vector<8x1xf32>
    %27 = vector.broadcast %26 : vector<8x1xf32> to vector<8x8xf32>
    %28 = arith.divf %24, %27 : vector<8x8xf32>
    %c0_15 = arith.constant 0 : index
    %c0_16 = arith.constant 0 : index
    %c0_17 = arith.constant 0 : index
    %29 = vector.load %arg5[%c0_15, %c0_16, %c0_17] : memref<1x8x8xf32, #tpu.memory_space<vmem>>, vector<1x8x8xf32>
    %30 = vector.shape_cast %29 : vector<1x8x8xf32> to vector<8x8xf32>
    %cst_18 = arith.constant 2.000000e-01 : f32
    %31 = vector.broadcast %cst_18 : f32 to vector<8x8xf32>
    %32 = arith.cmpf oge, %30, %31 : vector<8x8xf32>
    %cst_19 = arith.constant 1.250000e+00 : f32
    %33 = vector.broadcast %cst_19 : f32 to vector<8x8xf32>
    %34 = arith.mulf %28, %33 : vector<8x8xf32>
    %cst_20 = arith.constant 0.000000e+00 : f32
    %35 = vector.broadcast %cst_20 : f32 to vector<8x8xf32>
    %36 = arith.select %32, %34, %35 : vector<8x8xi1>, vector<8x8xf32>
    %37 = arith.truncf %36 : vector<8x8xf32> to vector<8x8xbf16>
    %38 = arith.truncf %8 : vector<8x64xf32> to vector<8x64xbf16>
    %cst_21 = arith.constant dense<0.000000e+00> : vector<8x64xf32>
    %39 = tpu.matmul %37, %38, %cst_21 {dimension_numbers = #tpu.dot_dimension_numbers<[1], [0], [0], [1], [0, 0, 1, 1], [], []>} : vector<8x8xbf16>, vector<8x64xbf16>, vector<8x64xf32> -> vector<8x64xf32>
    %c0_22 = arith.constant 0 : index
    %c0_23 = arith.constant 0 : index
    %c0_24 = arith.constant 0 : index
    %40 = vector.load %arg6[%c0_22, %c0_23, %c0_24] : memref<1x8x64xf32, #tpu.memory_space<vmem>>, vector<1x8x64xf32>
    %41 = vector.shape_cast %40 : vector<1x8x64xf32> to vector<8x64xf32>
    %42 = vector.shape_cast %39 : vector<8x64xf32> to vector<1x8x64xf32>
    tpu.vector_store %arg6[%c0_22, %c0_23, %c0_24], %42 {strides = array<i32>} : memref<1x8x64xf32, #tpu.memory_space<vmem>>, vector<1x8x64xf32>,
    return
  }
  func.func @transform_0(%arg0: i32) -> (i32, i32, i32) {
    %c0_i32 = arith.constant 0 : i32
    %c0_i32_0 = arith.constant 0 : i32
    %c0_i32_1 = arith.constant 0 : i32
    return %arg0, %c0_i32, %c0_i32_0 : i32, i32, i32
  }
  func.func @transform_1(%arg0: i32) -> (i32, i32) {
    %c0_i32 = arith.constant 0 : i32
    %c0_i32_0 = arith.constant 0 : i32
    %c0_i32_1 = arith.constant 0 : i32
    return %c0_i32, %c0_i32_0 : i32, i32
  }
  func.func @transform_2(%arg0: i32) -> (i32, i32) {
    %c0_i32 = arith.constant 0 : i32
    %c0_i32_0 = arith.constant 0 : i32
    %c0_i32_1 = arith.constant 0 : i32
    return %c0_i32, %c0_i32_0 : i32, i32
  }
  func.func @transform_3(%arg0: i32) -> (i32, i32) {
    %c0_i32 = arith.constant 0 : i32
    %c0_i32_0 = arith.constant 0 : i32
    %c0_i32_1 = arith.constant 0 : i32
    return %c0_i32, %c0_i32_0 : i32, i32
  }
  func.func @transform_4(%arg0: i32) -> (i32, i32, i32) {
    %c0_i32 = arith.constant 0 : i32
    %c0_i32_0 = arith.constant 0 : i32
    %c0_i32_1 = arith.constant 0 : i32
    return %arg0, %c0_i32, %c0_i32_0 : i32, i32, i32
  }
  func.func @transform_5(%arg0: i32) -> (i32, i32, i32) {
    %c0_i32 = arith.constant 0 : i32
    %c0_i32_0 = arith.constant 0 : i32
    %c0_i32_1 = arith.constant 0 : i32
    return %arg0, %c0_i32, %c0_i32_0 : i32, i32, i32
  }
}

</mosaic_0001>

<llo_original>
// kernel: tpu_custom_call.1
$region0: #{tpu_custom_call.1}
  #allocation0 [shape = 'u32[]', space=smem, size = 0x4, offset = 0x4, fixed_abs, tag = 'smem constant byte address 0x4 - core index']
  #allocation1 [shape = 'u32[144,128]{1,0:T(1,128)}', space=vmem, size = 0x12000, scoped, tag = 'internal scratch']
  %s0 = inlined_call_operand.vmem [shape: f32[2,8,384], index: 0, kind: input, shape index: {}]
  %s1 = inlined_call_operand.vmem [shape: bf16[384,64], index: 1, kind: input, shape index: {}]
  %s2 = inlined_call_operand.vmem [shape: bf16[384,64], index: 2, kind: input, shape index: {}]
  %s3 = inlined_call_operand.vmem [shape: bf16[384,64], index: 3, kind: input, shape index: {}]
  %s4 = inlined_call_operand.vmem [shape: f32[2,8,8], index: 4, kind: input, shape index: {}]
  %s5 = inlined_call_operand.hbm [shape: f32[2,8,64], index: 5, kind: output, shape index: {}]
  %s6 = sld [smem:[#allocation0]]
  $region53: #{tpu_custom_call.1} parent=0
    _
  %s8 = ssub.s32 1, %s6
  %s9 = scalar_select 0, %s8, %s6
  $region1: #{tpu_custom_call.1} parent=0
    #allocation2 [shape = 'u8[8192]{0}', space=vmem, size = 0x2000, scoped, tag = 'output window, operand 0']
    #allocation3 [shape = 's32[2]{0}', space=sflag, size = 0x8, scoped, tag = 'scoped memory for tpu_custom_call.1']
    %10 = vsyncpa [#allocation3], 0
    %s11 = scalar_lea.sflag [#allocation3], 1
    %12 = vsyncpa %s11, 0
    loop: start=0, step=1, limit=4
    $region2: #{tpu_custom_call.1} parent=1 // loop_pre_header
      _
    $region3: #{tpu_custom_call.1} parent=1 // loop_header
      %s14 = sphi 0, %s18
      %p15 = scmp.ge.s32.totalorder %s14, 4
      %s24 = sphi 0, %s26
      %s27 = sphi 0, %s24
      %s28 = sphi 0, %s27
      %s44 = sphi 0, %s28
      %s48 = sphi 0, %s48
      %s50 = sphi 0, %s48
      %s51 = sphi 0, %s50
      %s65 = sphi 0, %s51
      %s69 = sphi 0, %s69
      %s71 = sphi 0, %s69
      %s72 = sphi 0, %s71
      %s86 = sphi 0, %s72
      %s90 = sphi 0, %s90
      %s92 = sphi 0, %s90
      %s93 = sphi 0, %s92
      %s107 = sphi 0, %s93
      %s113 = sphi 0, %s115
      %s116 = sphi 0, %s113
      %s117 = sphi 0, %s116
      %s133 = sphi 0, %s117
      %s139 = sphi 0, %s141
      %s142 = sphi 0, %s139
      %s143 = sphi 0, %s142
      %s159 = sphi 0, %s143
    $region4: #{tpu_custom_call.1} parent=1 // loop_header_branch
      %17 = sbr.rel (%p15) target = $region8
    $region5: #{tpu_custom_call.1} parent=1 // loop_body
      %s19 = ssub.s32 %s14, 1
      %s20 = ssub.s32 %s14, 2
      %s21 = sadd.s32 %s14, 1
      %s22 = ssub.s32 %s14, %s21
      %p23 = scmp.eq.s32.totalorder %s22, 0
      %s25 = sadd.s32 %s24, 1
      %s26 = scalar_select %p23, %s24, %s25
      %p29 = pneg %p23
      %p30 = scmp.eq.s32.totalorder %s14, 1
      %p31 = por %p29, %p30
      %p32 = scmp.ne.s32.totalorder %s24, %s27
      %p33 = scmp.eq.s32.totalorder %s14, 0
      %p34 = por %p32, %p33
      %p35 = scmp.ne.s32.totalorder %s24, %s27
      %p36 = scmp.eq.s32.totalorder %s19, 1
      %p37 = por %p35, %p36
      %p38 = scmp.ne.s32.totalorder %s27, %s28
      %p39 = scmp.eq.s32.totalorder %s19, 0
      %p40 = por %p38, %p39
      %p41 = scmp.ne.s32.totalorder %s27, %s28
      %p42 = scmp.eq.s32.totalorder %s20, 1
      %p43 = por %p41, %p42
      %p45 = scmp.ne.s32.totalorder %s28, %s44
      %p46 = scmp.eq.s32.totalorder %s20, 0
      %p47 = por %p45, %p46
      %s49 = sadd.s32 %s48, 1
      %p52 = scmp.eq.s32.totalorder %s14, 1
      %p53 = scmp.ne.s32.totalorder %s48, %s50
      %p54 = scmp.eq.s32.totalorder %s14, 0
      %p55 = por %p53, %p54
      %p56 = scmp.ne.s32.totalorder %s48, %s50
      %p57 = scmp.eq.s32.totalorder %s19, 1
      %p58 = por %p56, %p57
      %p59 = scmp.ne.s32.totalorder %s50, %s51
      %p60 = scmp.eq.s32.totalorder %s19, 0
      %p61 = por %p59, %p60
      %p62 = scmp.ne.s32.totalorder %s50, %s51
      %p63 = scmp.eq.s32.totalorder %s20, 1
      %p64 = por %p62, %p63
      %p66 = scmp.ne.s32.totalorder %s51, %s65
      %p67 = scmp.eq.s32.totalorder %s20, 0
      %p68 = por %p66, %p67
      %s70 = sadd.s32 %s69, 1
      %p73 = scmp.eq.s32.totalorder %s14, 1
      %p74 = scmp.ne.s32.totalorder %s69, %s71
      %p75 = scmp.eq.s32.totalorder %s14, 0
      %p76 = por %p74, %p75
      %p77 = scmp.ne.s32.totalorder %s69, %s71
      %p78 = scmp.eq.s32.totalorder %s19, 1
      %p79 = por %p77, %p78
      %p80 = scmp.ne.s32.totalorder %s71, %s72
      %p81 = scmp.eq.s32.totalorder %s19, 0
      %p82 = por %p80, %p81
      %p83 = scmp.ne.s32.totalorder %s71, %s72
      %p84 = scmp.eq.s32.totalorder %s20, 1
      %p85 = por %p83, %p84
      %p87 = scmp.ne.s32.totalorder %s72, %s86
      %p88 = scmp.eq.s32.totalorder %s20, 0
      %p89 = por %p87, %p88
      %s91 = sadd.s32 %s90, 1
      %p94 = scmp.eq.s32.totalorder %s14, 1
      %p95 = scmp.ne.s32.totalorder %s90, %s92
      %p96 = scmp.eq.s32.totalorder %s14, 0
      %p97 = por %p95, %p96
      %p98 = scmp.ne.s32.totalorder %s90, %s92
      %p99 = scmp.eq.s32.totalorder %s19, 1
      %p100 = por %p98, %p99
      %p101 = scmp.ne.s32.totalorder %s92, %s93
      %p102 = scmp.eq.s32.totalorder %s19, 0
      %p103 = por %p101, %p102
      %p104 = scmp.ne.s32.totalorder %s92, %s93
      %p105 = scmp.eq.s32.totalorder %s20, 1
      %p106 = por %p104, %p105
      %p108 = scmp.ne.s32.totalorder %s93, %s107
      %p109 = scmp.eq.s32.totalorder %s20, 0
      %p110 = por %p108, %p109
      %s111 = ssub.s32 %s14, %s21
      %p112 = scmp.eq.s32.totalorder %s111, 0
      %s114 = sadd.s32 %s113, 1
      %s115 = scalar_select %p112, %s113, %s114
      %p118 = pneg %p112
      %p119 = scmp.eq.s32.totalorder %s14, 1
      %p120 = por %p118, %p119
      %p121 = scmp.ne.s32.totalorder %s113, %s116
      %p122 = scmp.eq.s32.totalorder %s14, 0
      %p123 = por %p121, %p122
      %p124 = scmp.ne.s32.totalorder %s113, %s116
      %p125 = scmp.eq.s32.totalorder %s19, 1
      %p126 = por %p124, %p125
      %p127 = scmp.ne.s32.totalorder %s116, %s117
      %p128 = scmp.eq.s32.totalorder %s19, 0
      %p129 = por %p127, %p128
      %p130 = scmp.ne.s32.totalorder %s116, %s117
      %p131 = scmp.eq.s32.totalorder %s20, 1
      %p132 = por %p130, %p131
      %p134 = scmp.ne.s32.totalorder %s117, %s133
      %p135 = scmp.eq.s32.totalorder %s20, 0
      %p136 = por %p134, %p135
      %s137 = ssub.s32 %s14, %s21
      %p138 = scmp.eq.s32.totalorder %s137, 0
      %s140 = sadd.s32 %s139, 1
      %s141 = scalar_select %p138, %s139, %s140
      %p144 = pneg %p138
      %p145 = scmp.eq.s32.totalorder %s14, 1
      %p146 = por %p144, %p145
      %p147 = scmp.ne.s32.totalorder %s139, %s142
      %p148 = scmp.eq.s32.totalorder %s14, 0
      %p149 = por %p147, %p148
      %p150 = scmp.ne.s32.totalorder %s139, %s142
      %p151 = scmp.eq.s32.totalorder %s19, 1
      %p152 = por %p150, %p151
      %p153 = scmp.ne.s32.totalorder %s142, %s143
      %p154 = scmp.eq.s32.totalorder %s19, 0
      %p155 = por %p153, %p154
      %p156 = scmp.ne.s32.totalorder %s142, %s143
      %p157 = scmp.eq.s32.totalorder %s20, 1
      %p158 = por %p156, %p157
      %p160 = scmp.ne.s32.totalorder %s143, %s159
      %p161 = scmp.eq.s32.totalorder %s20, 0
      %p162 = por %p160, %p161
      %p163 = scmp.le.s32.totalorder 1, %s14
      %p164 = scmp.lt.s32.totalorder %s14, 3
      %p165 = pnand %p163, %p164
      %p166 = pneg %p165
      // Predicated region
      $region9: #{tpu_custom_call.1} parent=5 // pred_check
        _
      $region10: #{tpu_custom_call.1} parent=5 // pred_check_branch
        %168 = sbr.rel (%p165) target = $region12
      $region11: #{tpu_custom_call.1} parent=5 // pred_region
        %s169 = ssub.s32 %s14, 1
        // Predicated region
        $region13: #{tpu_custom_call.1} parent=11 // pred_check
          %p170 = pneg %p61
        $region14: #{tpu_custom_call.1} parent=11 // pred_check_branch
          %172 = sbr.rel (%p170) target = $region16
        $region15: #{tpu_custom_call.1} parent=11 // pred_region
          _
        $region16: #{tpu_custom_call.1} parent=11 // pred_fallthru
          _
        // Predicated region
        $region17: #{tpu_custom_call.1} parent=11 // pred_check
          %p173 = pneg %p82
        $region18: #{tpu_custom_call.1} parent=11 // pred_check_branch
          %175 = sbr.rel (%p173) target = $region20
        $region19: #{tpu_custom_call.1} parent=11 // pred_region
          _
        $region20: #{tpu_custom_call.1} parent=11 // pred_fallthru
          _
        // Predicated region
        $region21: #{tpu_custom_call.1} parent=11 // pred_check
          %p176 = pneg %p103
        $region22: #{tpu_custom_call.1} parent=11 // pred_check_branch
          %178 = sbr.rel (%p176) target = $region24
        $region23: #{tpu_custom_call.1} parent=11 // pred_region
          _
        $region24: #{tpu_custom_call.1} parent=11 // pred_fallthru
          _
      $region12: #{tpu_custom_call.1} parent=5 // pred_fallthru
        _
      %p179 = scmp.lt.s32.totalorder %s14, 2
      // Predicated region
      $region25: #{tpu_custom_call.1} parent=5 // pred_check
        %p180 = pneg %p179
      $region26: #{tpu_custom_call.1} parent=5 // pred_check_branch
        %182 = sbr.rel (%p180) target = $region28
      $region27: #{tpu_custom_call.1} parent=5 // pred_region
        // Predicated region
        $region29: #{tpu_custom_call.1} parent=27 // pred_check
          %p183 = pneg %p34
        $region30: #{tpu_custom_call.1} parent=27 // pred_check_branch
          %185 = sbr.rel (%p183) target = $region32
        $region31: #{tpu_custom_call.1} parent=27 // pred_region
          %p186 = scmp.lt.s32.totalorder %s14, 1
          %s187 = scalar_select %p186, %s14, 1
          %s188 = smul.addr %s187, 3
          %s189 = smul.addr %s188, 8
          %s190 = scalar_lea.vmem %s0, %s189
        $region32: #{tpu_custom_call.1} parent=27 // pred_fallthru
          _
        // Predicated region
        $region33: #{tpu_custom_call.1} parent=27 // pred_check
          %p191 = pneg %p123
        $region34: #{tpu_custom_call.1} parent=27 // pred_check_branch
          %193 = sbr.rel (%p191) target = $region36
        $region35: #{tpu_custom_call.1} parent=27 // pred_region
          %p194 = scmp.lt.s32.totalorder %s14, 1
          %s195 = scalar_select %p194, %s14, 1
          %s196 = smul.addr %s195, 8
          %s197 = scalar_lea.vmem %s4, %s196
        $region36: #{tpu_custom_call.1} parent=27 // pred_fallthru
          _
      $region28: #{tpu_custom_call.1} parent=5 // pred_fallthru
        _
      %p198 = scmp.le.s32.totalorder 1, %s14
      %p199 = scmp.lt.s32.totalorder %s14, 3
      %p200 = pnand %p198, %p199
      %p201 = pneg %p200
      // Predicated region
      $region37: #{tpu_custom_call.1} parent=5 // pred_check
        _
      $region38: #{tpu_custom_call.1} parent=5 // pred_check_branch
        %203 = sbr.rel (%p200) target = $region40
      $region39: #{tpu_custom_call.1} parent=5 // pred_region
        %s204 = ssub.s32 %s14, 1
        %p205 = scmp.lt.s32.totalorder %s19, 1
        %s206 = scalar_select %p205, %s19, 1
        %s207 = smul.addr %s206, 3
        %s208 = smul.addr %s207, 8
        %s209 = scalar_lea.vmem %s0, %s208
        %p210 = pneg %p40
        %p211 = pneg %p37
        %p212 = pneg %p61
        %p213 = pneg %p58
        %p214 = pneg %p82
        %p215 = pneg %p79
        %p216 = pneg %p103
        %p217 = pneg %p100
        %p218 = scmp.lt.s32.totalorder %s19, 1
        %s219 = scalar_select %p218, %s19, 1
        %s220 = smul.addr %s219, 8
        %s221 = scalar_lea.vmem %s4, %s220
        %p222 = pneg %p129
        %p223 = pneg %p126
        %p224 = pneg %p155
        %p225 = pneg %p152
        %s226 = sand.u32 %s142, 1
        %s227 = scalar_lea.sflag [#allocation3], %s226
        %s228 = sand.u32 %s142, 1
        %s229 = smul.addr %s228, 8
        %s230 = scalar_lea.vmem [#allocation2], %s229
        %p231 = scmp.lt.s32.totalorder %s19, 1
        %s232 = scalar_select %p231, %s19, 1
        %s233 = smul.addr %s232, 3
        %s234 = smul.addr %s233, 8
        %s235 = scalar_lea.vmem %s0, %s234
        %p236 = scmp.lt.s32.totalorder %s19, 1
        %s237 = scalar_select %p236, %s19, 1
        %s238 = smul.addr %s237, 8
        %s239 = scalar_lea.vmem %s4, %s238
        %v241 = vld [vmem:[%s235] sm:$0xff]
        %v242 = vld [vmem:[%s235 + $0x8] sm:$0xff]
        %v243 = vld [vmem:[%s235 + $0x10] sm:$0xff]
        %v244 = vpack.c.bf16 %v241, %v241
        %v245 = vpack.c.bf16 %v242, %v242
        %v246 = vpack.c.bf16 %v243, %v243
        %v247 = vld [vmem:[%s1] sm:$0xf]
        %v248 = vld [vmem:[%s1 + $0x4] sm:$0xf]
        %v249 = vld [vmem:[%s1 + $0x8] sm:$0xf]
        %v250 = vld [vmem:[%s1 + $0xc] sm:$0xf]
        %v251 = vld [vmem:[%s1 + $0x10] sm:$0xf]
        %v252 = vld [vmem:[%s1 + $0x14] sm:$0xf]
        %v253 = vld [vmem:[%s1 + $0x18] sm:$0xf]
        %v254 = vld [vmem:[%s1 + $0x1c] sm:$0xf]
        %v255 = vld [vmem:[%s1 + $0x20] sm:$0xf]
        %v256 = vld [vmem:[%s1 + $0x24] sm:$0xf]
        %v257 = vld [vmem:[%s1 + $0x28] sm:$0xf]
        %v258 = vld [vmem:[%s1 + $0x2c] sm:$0xf]
        %v259 = vld [vmem:[%s1 + $0x30] sm:$0xf]
        %v260 = vld [vmem:[%s1 + $0x34] sm:$0xf]
        %v261 = vld [vmem:[%s1 + $0x38] sm:$0xf]
        %v262 = vld [vmem:[%s1 + $0x3c] sm:$0xf]
        %v263 = vld [vmem:[%s1 + $0x40] sm:$0xf]
        %v264 = vld [vmem:[%s1 + $0x44] sm:$0xf]
        %v265 = vld [vmem:[%s1 + $0x48] sm:$0xf]
        %v266 = vld [vmem:[%s1 + $0x4c] sm:$0xf]
        %v267 = vld [vmem:[%s1 + $0x50] sm:$0xf]
        %v268 = vld [vmem:[%s1 + $0x54] sm:$0xf]
        %v269 = vld [vmem:[%s1 + $0x58] sm:$0xf]
        %v270 = vld [vmem:[%s1 + $0x5c] sm:$0xf]
        %v271 = vld [vmem:[%s1 + $0x60] sm:$0xf]
        %v272 = vld [vmem:[%s1 + $0x64] sm:$0xf]
        %v273 = vld [vmem:[%s1 + $0x68] sm:$0xf]
        %v274 = vld [vmem:[%s1 + $0x6c] sm:$0xf]
        %v275 = vld [vmem:[%s1 + $0x70] sm:$0xf]
        %v276 = vld [vmem:[%s1 + $0x74] sm:$0xf]
        %v277 = vld [vmem:[%s1 + $0x78] sm:$0xf]
        %v278 = vld [vmem:[%s1 + $0x7c] sm:$0xf]
        %v279 = vld [vmem:[%s1 + $0x80] sm:$0xf]
        %v280 = vld [vmem:[%s1 + $0x84] sm:$0xf]
        %v281 = vld [vmem:[%s1 + $0x88] sm:$0xf]
        %v282 = vld [vmem:[%s1 + $0x8c] sm:$0xf]
        %v283 = vld [vmem:[%s1 + $0x90] sm:$0xf]
        %v284 = vld [vmem:[%s1 + $0x94] sm:$0xf]
        %v285 = vld [vmem:[%s1 + $0x98] sm:$0xf]
        %v286 = vld [vmem:[%s1 + $0x9c] sm:$0xf]
        %v287 = vld [vmem:[%s1 + $0xa0] sm:$0xf]
        %v288 = vld [vmem:[%s1 + $0xa4] sm:$0xf]
        %v289 = vld [vmem:[%s1 + $0xa8] sm:$0xf]
        %v290 = vld [vmem:[%s1 + $0xac] sm:$0xf]
        %v291 = vld [vmem:[%s1 + $0xb0] sm:$0xf]
        %v292 = vld [vmem:[%s1 + $0xb4] sm:$0xf]
        %v293 = vld [vmem:[%s1 + $0xb8] sm:$0xf]
        %v294 = vld [vmem:[%s1 + $0xbc] sm:$0xf]
        %v343 = vunpack.c.l.b16 %v247
        %v344 = vunpack.c.l.b16 %v248
        %v345 = vunpack.c.l.b16 %v249
        %v346 = vunpack.c.l.b16 %v250
        %v347 = vunpack.c.l.b16 %v251
        %v348 = vunpack.c.l.b16 %v252
        %v349 = vunpack.c.l.b16 %v253
        %v350 = vunpack.c.l.b16 %v254
        %v351 = vunpack.c.l.b16 %v255
        %v352 = vunpack.c.l.b16 %v256
        %v353 = vunpack.c.l.b16 %v257
        %v354 = vunpack.c.l.b16 %v258
        %v355 = vunpack.c.l.b16 %v259
        %v356 = vunpack.c.l.b16 %v260
        %v357 = vunpack.c.l.b16 %v261
        %v358 = vunpack.c.l.b16 %v262
        %v359 = vunpack.c.l.b16 %v263
        %v360 = vunpack.c.l.b16 %v264
        %v361 = vunpack.c.l.b16 %v265
        %v362 = vunpack.c.l.b16 %v266
        %v363 = vunpack.c.l.b16 %v267
        %v364 = vunpack.c.l.b16 %v268
        %v365 = vunpack.c.l.b16 %v269
        %v366 = vunpack.c.l.b16 %v270
        %v367 = vunpack.c.l.b16 %v271
        %v368 = vunpack.c.l.b16 %v272
        %v369 = vunpack.c.l.b16 %v273
        %v370 = vunpack.c.l.b16 %v274
        %v371 = vunpack.c.l.b16 %v275
        %v372 = vunpack.c.l.b16 %v276
        %v373 = vunpack.c.l.b16 %v277
        %v374 = vunpack.c.l.b16 %v278
        %v375 = vunpack.c.l.b16 %v279
        %v376 = vunpack.c.l.b16 %v280
        %v377 = vunpack.c.l.b16 %v281
        %v378 = vunpack.c.l.b16 %v282
        %v379 = vunpack.c.l.b16 %v283
        %v380 = vunpack.c.l.b16 %v284
        %v381 = vunpack.c.l.b16 %v285
        %v382 = vunpack.c.l.b16 %v286
        %v383 = vunpack.c.l.b16 %v287
        %v384 = vunpack.c.l.b16 %v288
        %v385 = vunpack.c.l.b16 %v289
        %v386 = vunpack.c.l.b16 %v290
        %v387 = vunpack.c.l.b16 %v291
        %v388 = vunpack.c.l.b16 %v292
        %v389 = vunpack.c.l.b16 %v293
        %v390 = vunpack.c.l.b16 %v294
        %v391 = vpack.c.b16 %v344, %v343
        %v392 = vpack.c.b16 %v346, %v345
        %v393 = vpack.c.b16 %v348, %v347
        %v394 = vpack.c.b16 %v350, %v349
        %v395 = vpack.c.b16 %v352, %v351
        %v396 = vpack.c.b16 %v354, %v353
        %v397 = vpack.c.b16 %v356, %v355
        %v398 = vpack.c.b16 %v358, %v357
        %v399 = vpack.c.b16 %v360, %v359
        %v400 = vpack.c.b16 %v362, %v361
        %v401 = vpack.c.b16 %v364, %v363
        %v402 = vpack.c.b16 %v366, %v365
        %v403 = vpack.c.b16 %v368, %v367
        %v404 = vpack.c.b16 %v370, %v369
        %v405 = vpack.c.b16 %v372, %v371
        %v406 = vpack.c.b16 %v374, %v373
        %v407 = vpack.c.b16 %v376, %v375
        %v408 = vpack.c.b16 %v378, %v377
        %v409 = vpack.c.b16 %v380, %v379
        %v410 = vpack.c.b16 %v382, %v381
        %v411 = vpack.c.b16 %v384, %v383
        %v412 = vpack.c.b16 %v386, %v385
        %v413 = vpack.c.b16 %v388, %v387
        %v414 = vpack.c.b16 %v390, %v389
        %439 = vmatprep.subr.bf16.mxu0 0
        %440 = vmatpush1.bf16.msra.mxu0 %v398
        %441 = vmatprep.subr.bf16.mxu0 0
        %442 = vmatpush1.bf16.msra.mxu0 %v397
        %443 = vmatprep.subr.bf16.mxu0 0
        %444 = vmatpush1.bf16.msra.mxu0 %v396
        %445 = vmatprep.subr.bf16.mxu0 0
        %446 = vmatpush1.bf16.msra.mxu0 %v395
        %447 = vmatprep.subr.bf16.mxu0 0
        %448 = vmatpush1.bf16.msra.mxu0 %v394
        %449 = vmatprep.subr.bf16.mxu0 0
        %450 = vmatpush1.bf16.msra.mxu0 %v393
        %451 = vmatprep.subr.bf16.mxu0 0
        %452 = vmatpush1.bf16.msra.mxu0 %v392
        %453 = vmatprep.subr.bf16.mxu0 0
        %454 = vmatpush1.bf16.msra.mxu0 %v391
        %455 = vmatprep.subr.bf16.mxu0 0
        %456 = vmatpush2.bf16.msra.mxu0 %v406
        %457 = vmatprep.subr.bf16.mxu0 0
        %458 = vmatpush2.bf16.msra.mxu0 %v405
        %459 = vmatprep.subr.bf16.mxu0 0
        %460 = vmatpush2.bf16.msra.mxu0 %v404
        %461 = vmatprep.subr.bf16.mxu0 0
        %462 = vmatpush2.bf16.msra.mxu0 %v403
        %463 = vmatprep.subr.bf16.mxu0 0
        %464 = vmatpush2.bf16.msra.mxu0 %v402
        %465 = vmatprep.subr.bf16.mxu0 0
        %466 = vmatpush2.bf16.msra.mxu0 %v401
        %467 = vmatprep.subr.bf16.mxu0 0
        %468 = vmatpush2.bf16.msra.mxu0 %v400
        %469 = vmatprep.subr.bf16.mxu0 0
        %470 = vmatpush2.bf16.msra.mxu0 %v399
        %471 = vmatprep.mubr.bf16.mxu0 %v245
        %472 = vmatmul.mubr.bf16.gmra.mxu0 %v244
        %v473 = vpop.f32.mrf.mxu0
        %v474 = vadd.f32 0.0, %v473
        %v475 = vpop.f32.mrf.mxu0
        %v476 = vpop.f32.mrf.mxu0
        %v477 = vpop.f32.mrf.mxu0
        %478 = vdwg.mxu0
        %479 = vmatprep.subr.bf16.mxu0 0
        %480 = vmatpush1.bf16.msra.mxu0 %v414
        %481 = vmatprep.subr.bf16.mxu0 0
        %482 = vmatpush1.bf16.msra.mxu0 %v413
        %483 = vmatprep.subr.bf16.mxu0 0
        %484 = vmatpush1.bf16.msra.mxu0 %v412
        %485 = vmatprep.subr.bf16.mxu0 0
        %486 = vmatpush1.bf16.msra.mxu0 %v411
        %487 = vmatprep.subr.bf16.mxu0 0
        %488 = vmatpush1.bf16.msra.mxu0 %v410
        %489 = vmatprep.subr.bf16.mxu0 0
        %490 = vmatpush1.bf16.msra.mxu0 %v409
        %491 = vmatprep.subr.bf16.mxu0 0
        %492 = vmatpush1.bf16.msra.mxu0 %v408
        %493 = vmatprep.subr.bf16.mxu0 0
        %494 = vmatpush1.bf16.msra.mxu0 %v407
        %495 = vmatprep.subr.bf16.mxu0 0
        %496 = vmatpush2.bf16.msra.mxu0 0
        %497 = vmatprep.subr.bf16.mxu0 0
        %498 = vmatpush2.bf16.msra.mxu0 0
        %499 = vmatprep.subr.bf16.mxu0 0
        %500 = vmatpush2.bf16.msra.mxu0 0
        %501 = vmatprep.subr.bf16.mxu0 0
        %502 = vmatpush2.bf16.msra.mxu0 0
        %503 = vmatprep.subr.bf16.mxu0 0
        %504 = vmatpush2.bf16.msra.mxu0 0
        %505 = vmatprep.subr.bf16.mxu0 0
        %506 = vmatpush2.bf16.msra.mxu0 0
        %507 = vmatprep.subr.bf16.mxu0 0
        %508 = vmatpush2.bf16.msra.mxu0 0
        %509 = vmatprep.subr.bf16.mxu0 0
        %510 = vmatpush2.bf16.msra.mxu0 0
        %511 = vmatprep.mubr.bf16.mxu0 0
        %512 = vmatmul.mubr.bf16.gmra.mxu0 %v246
        %v513 = vpop.f32.mrf.mxu0
        %v514 = vadd.f32 %v474, %v513
        %v515 = vpop.f32.mrf.mxu0
        %v516 = vpop.f32.mrf.mxu0
        %v517 = vpop.f32.mrf.mxu0
        %518 = vdwg.mxu0
        %v519 = vld [vmem:[%s2] sm:$0xf]
        %v520 = vld [vmem:[%s2 + $0x4] sm:$0xf]
        %v521 = vld [vmem:[%s2 + $0x8] sm:$0xf]
        %v522 = vld [vmem:[%s2 + $0xc] sm:$0xf]
        %v523 = vld [vmem:[%s2 + $0x10] sm:$0xf]
        %v524 = vld [vmem:[%s2 + $0x14] sm:$0xf]
        %v525 = vld [vmem:[%s2 + $0x18] sm:$0xf]
        %v526 = vld [vmem:[%s2 + $0x1c] sm:$0xf]
        %v527 = vld [vmem:[%s2 + $0x20] sm:$0xf]
        %v528 = vld [vmem:[%s2 + $0x24] sm:$0xf]
        %v529 = vld [vmem:[%s2 + $0x28] sm:$0xf]
        %v530 = vld [vmem:[%s2 + $0x2c] sm:$0xf]
        %v531 = vld [vmem:[%s2 + $0x30] sm:$0xf]
        %v532 = vld [vmem:[%s2 + $0x34] sm:$0xf]
        %v533 = vld [vmem:[%s2 + $0x38] sm:$0xf]
        %v534 = vld [vmem:[%s2 + $0x3c] sm:$0xf]
        %v535 = vld [vmem:[%s2 + $0x40] sm:$0xf]
        %v536 = vld [vmem:[%s2 + $0x44] sm:$0xf]
        %v537 = vld [vmem:[%s2 + $0x48] sm:$0xf]
        %v538 = vld [vmem:[%s2 + $0x4c] sm:$0xf]
        %v539 = vld [vmem:[%s2 + $0x50] sm:$0xf]
        %v540 = vld [vmem:[%s2 + $0x54] sm:$0xf]
        %v541 = vld [vmem:[%s2 + $0x58] sm:$0xf]
        %v542 = vld [vmem:[%s2 + $0x5c] sm:$0xf]
        %v543 = vld [vmem:[%s2 + $0x60] sm:$0xf]
        %v544 = vld [vmem:[%s2 + $0x64] sm:$0xf]
        %v545 = vld [vmem:[%s2 + $0x68] sm:$0xf]
        %v546 = vld [vmem:[%s2 + $0x6c] sm:$0xf]
        %v547 = vld [vmem:[%s2 + $0x70] sm:$0xf]
        %v548 = vld [vmem:[%s2 + $0x74] sm:$0xf]
        %v549 = vld [vmem:[%s2 + $0x78] sm:$0xf]
        %v550 = vld [vmem:[%s2 + $0x7c] sm:$0xf]
        %v551 = vld [vmem:[%s2 + $0x80] sm:$0xf]
        %v552 = vld [vmem:[%s2 + $0x84] sm:$0xf]
        %v553 = vld [vmem:[%s2 + $0x88] sm:$0xf]
        %v554 = vld [vmem:[%s2 + $0x8c] sm:$0xf]
        %v555 = vld [vmem:[%s2 + $0x90] sm:$0xf]
        %v556 = vld [vmem:[%s2 + $0x94] sm:$0xf]
        %v557 = vld [vmem:[%s2 + $0x98] sm:$0xf]
        %v558 = vld [vmem:[%s2 + $0x9c] sm:$0xf]
        %v559 = vld [vmem:[%s2 + $0xa0] sm:$0xf]
        %v560 = vld [vmem:[%s2 + $0xa4] sm:$0xf]
        %v561 = vld [vmem:[%s2 + $0xa8] sm:$0xf]
        %v562 = vld [vmem:[%s2 + $0xac] sm:$0xf]
        %v563 = vld [vmem:[%s2 + $0xb0] sm:$0xf]
        %v564 = vld [vmem:[%s2 + $0xb4] sm:$0xf]
        %v565 = vld [vmem:[%s2 + $0xb8] sm:$0xf]
        %v566 = vld [vmem:[%s2 + $0xbc] sm:$0xf]
        %v615 = vunpack.c.l.b16 %v519
        %v616 = vunpack.c.l.b16 %v520
        %v617 = vunpack.c.l.b16 %v521
        %v618 = vunpack.c.l.b16 %v522
        %v619 = vunpack.c.l.b16 %v523
        %v620 = vunpack.c.l.b16 %v524
        %v621 = vunpack.c.l.b16 %v525
        %v622 = vunpack.c.l.b16 %v526
        %v623 = vunpack.c.l.b16 %v527
        %v624 = vunpack.c.l.b16 %v528
        %v625 = vunpack.c.l.b16 %v529
        %v626 = vunpack.c.l.b16 %v530
        %v627 = vunpack.c.l.b16 %v531
        %v628 = vunpack.c.l.b16 %v532
        %v629 = vunpack.c.l.b16 %v533
        %v630 = vunpack.c.l.b16 %v534
        %v631 = vunpack.c.l.b16 %v535
        %v632 = vunpack.c.l.b16 %v536
        %v633 = vunpack.c.l.b16 %v537
        %v634 = vunpack.c.l.b16 %v538
        %v635 = vunpack.c.l.b16 %v539
        %v636 = vunpack.c.l.b16 %v540
        %v637 = vunpack.c.l.b16 %v541
        %v638 = vunpack.c.l.b16 %v542
        %v639 = vunpack.c.l.b16 %v543
        %v640 = vunpack.c.l.b16 %v544
        %v641 = vunpack.c.l.b16 %v545
        %v642 = vunpack.c.l.b16 %v546
        %v643 = vunpack.c.l.b16 %v547
        %v644 = vunpack.c.l.b16 %v548
        %v645 = vunpack.c.l.b16 %v549
        %v646 = vunpack.c.l.b16 %v550
        %v647 = vunpack.c.l.b16 %v551
        %v648 = vunpack.c.l.b16 %v552
        %v649 = vunpack.c.l.b16 %v553
        %v650 = vunpack.c.l.b16 %v554
        %v651 = vunpack.c.l.b16 %v555
        %v652 = vunpack.c.l.b16 %v556
        %v653 = vunpack.c.l.b16 %v557
        %v654 = vunpack.c.l.b16 %v558
        %v655 = vunpack.c.l.b16 %v559
        %v656 = vunpack.c.l.b16 %v560
        %v657 = vunpack.c.l.b16 %v561
        %v658 = vunpack.c.l.b16 %v562
        %v659 = vunpack.c.l.b16 %v563
        %v660 = vunpack.c.l.b16 %v564
        %v661 = vunpack.c.l.b16 %v565
        %v662 = vunpack.c.l.b16 %v566
        %v663 = vpack.c.b16 %v616, %v615
        %v664 = vpack.c.b16 %v618, %v617
        %v665 = vpack.c.b16 %v620, %v619
        %v666 = vpack.c.b16 %v622, %v621
        %v667 = vpack.c.b16 %v624, %v623
        %v668 = vpack.c.b16 %v626, %v625
        %v669 = vpack.c.b16 %v628, %v627
        %v670 = vpack.c.b16 %v630, %v629
        %v671 = vpack.c.b16 %v632, %v631
        %v672 = vpack.c.b16 %v634, %v633
        %v673 = vpack.c.b16 %v636, %v635
        %v674 = vpack.c.b16 %v638, %v637
        %v675 = vpack.c.b16 %v640, %v639
        %v676 = vpack.c.b16 %v642, %v641
        %v677 = vpack.c.b16 %v644, %v643
        %v678 = vpack.c.b16 %v646, %v645
        %v679 = vpack.c.b16 %v648, %v647
        %v680 = vpack.c.b16 %v650, %v649
        %v681 = vpack.c.b16 %v652, %v651
        %v682 = vpack.c.b16 %v654, %v653
        %v683 = vpack.c.b16 %v656, %v655
        %v684 = vpack.c.b16 %v658, %v657
        %v685 = vpack.c.b16 %v660, %v659
        %v686 = vpack.c.b16 %v662, %v661
        %711 = vmatprep.subr.bf16.mxu0 0
        %712 = vmatpush1.bf16.msra.mxu0 %v670
        %713 = vmatprep.subr.bf16.mxu0 0
        %714 = vmatpush1.bf16.msra.mxu0 %v669
        %715 = vmatprep.subr.bf16.mxu0 0
        %716 = vmatpush1.bf16.msra.mxu0 %v668
        %717 = vmatprep.subr.bf16.mxu0 0
        %718 = vmatpush1.bf16.msra.mxu0 %v667
        %719 = vmatprep.subr.bf16.mxu0 0
        %720 = vmatpush1.bf16.msra.mxu0 %v666
        %721 = vmatprep.subr.bf16.mxu0 0
        %722 = vmatpush1.bf16.msra.mxu0 %v665
        %723 = vmatprep.subr.bf16.mxu0 0
        %724 = vmatpush1.bf16.msra.mxu0 %v664
        %725 = vmatprep.subr.bf16.mxu0 0
        %726 = vmatpush1.bf16.msra.mxu0 %v663
        %727 = vmatprep.subr.bf16.mxu0 0
        %728 = vmatpush2.bf16.msra.mxu0 %v678
        %729 = vmatprep.subr.bf16.mxu0 0
        %730 = vmatpush2.bf16.msra.mxu0 %v677
        %731 = vmatprep.subr.bf16.mxu0 0
        %732 = vmatpush2.bf16.msra.mxu0 %v676
        %733 = vmatprep.subr.bf16.mxu0 0
        %734 = vmatpush2.bf16.msra.mxu0 %v675
        %735 = vmatprep.subr.bf16.mxu0 0
        %736 = vmatpush2.bf16.msra.mxu0 %v674
        %737 = vmatprep.subr.bf16.mxu0 0
        %738 = vmatpush2.bf16.msra.mxu0 %v673
        %739 = vmatprep.subr.bf16.mxu0 0
        %740 = vmatpush2.bf16.msra.mxu0 %v672
        %741 = vmatprep.subr.bf16.mxu0 0
        %742 = vmatpush2.bf16.msra.mxu0 %v671
        %743 = vmatprep.mubr.bf16.mxu0 %v245
        %744 = vmatmul.mubr.bf16.gmra.mxu0 %v244
        %v745 = vpop.f32.mrf.mxu0
        %v746 = vadd.f32 0.0, %v745
        %v747 = vpop.f32.mrf.mxu0
        %v748 = vpop.f32.mrf.mxu0
        %v749 = vpop.f32.mrf.mxu0
        %750 = vdwg.mxu0
        %751 = vmatprep.subr.bf16.mxu0 0
        %752 = vmatpush1.bf16.msra.mxu0 %v686
        %753 = vmatprep.subr.bf16.mxu0 0
        %754 = vmatpush1.bf16.msra.mxu0 %v685
        %755 = vmatprep.subr.bf16.mxu0 0
        %756 = vmatpush1.bf16.msra.mxu0 %v684
        %757 = vmatprep.subr.bf16.mxu0 0
        %758 = vmatpush1.bf16.msra.mxu0 %v683
        %759 = vmatprep.subr.bf16.mxu0 0
        %760 = vmatpush1.bf16.msra.mxu0 %v682
        %761 = vmatprep.subr.bf16.mxu0 0
        %762 = vmatpush1.bf16.msra.mxu0 %v681
        %763 = vmatprep.subr.bf16.mxu0 0
        %764 = vmatpush1.bf16.msra.mxu0 %v680
        %765 = vmatprep.subr.bf16.mxu0 0
        %766 = vmatpush1.bf16.msra.mxu0 %v679
        %767 = vmatprep.subr.bf16.mxu0 0
        %768 = vmatpush2.bf16.msra.mxu0 0
        %769 = vmatprep.subr.bf16.mxu0 0
        %770 = vmatpush2.bf16.msra.mxu0 0
        %771 = vmatprep.subr.bf16.mxu0 0
        %772 = vmatpush2.bf16.msra.mxu0 0
        %773 = vmatprep.subr.bf16.mxu0 0
        %774 = vmatpush2.bf16.msra.mxu0 0
        %775 = vmatprep.subr.bf16.mxu0 0
        %776 = vmatpush2.bf16.msra.mxu0 0
        %777 = vmatprep.subr.bf16.mxu0 0
        %778 = vmatpush2.bf16.msra.mxu0 0
        %779 = vmatprep.subr.bf16.mxu0 0
        %780 = vmatpush2.bf16.msra.mxu0 0
        %781 = vmatprep.subr.bf16.mxu0 0
        %782 = vmatpush2.bf16.msra.mxu0 0
        %783 = vmatprep.mubr.bf16.mxu0 0
        %784 = vmatmul.mubr.bf16.gmra.mxu0 %v246
        %v785 = vpop.f32.mrf.mxu0
        %v786 = vadd.f32 %v746, %v785
        %v787 = vpop.f32.mrf.mxu0
        %v788 = vpop.f32.mrf.mxu0
        %v789 = vpop.f32.mrf.mxu0
        %790 = vdwg.mxu0
        %v791 = vld [vmem:[%s3] sm:$0xf]
        %v792 = vld [vmem:[%s3 + $0x4] sm:$0xf]
        %v793 = vld [vmem:[%s3 + $0x8] sm:$0xf]
        %v794 = vld [vmem:[%s3 + $0xc] sm:$0xf]
        %v795 = vld [vmem:[%s3 + $0x10] sm:$0xf]
        %v796 = vld [vmem:[%s3 + $0x14] sm:$0xf]
        %v797 = vld [vmem:[%s3 + $0x18] sm:$0xf]
        %v798 = vld [vmem:[%s3 + $0x1c] sm:$0xf]
        %v799 = vld [vmem:[%s3 + $0x20] sm:$0xf]
        %v800 = vld [vmem:[%s3 + $0x24] sm:$0xf]
        %v801 = vld [vmem:[%s3 + $0x28] sm:$0xf]
        %v802 = vld [vmem:[%s3 + $0x2c] sm:$0xf]
        %v803 = vld [vmem:[%s3 + $0x30] sm:$0xf]
        %v804 = vld [vmem:[%s3 + $0x34] sm:$0xf]
        %v805 = vld [vmem:[%s3 + $0x38] sm:$0xf]
        %v806 = vld [vmem:[%s3 + $0x3c] sm:$0xf]
        %v807 = vld [vmem:[%s3 + $0x40] sm:$0xf]
        %v808 = vld [vmem:[%s3 + $0x44] sm:$0xf]
        %v809 = vld [vmem:[%s3 + $0x48] sm:$0xf]
        %v810 = vld [vmem:[%s3 + $0x4c] sm:$0xf]
        %v811 = vld [vmem:[%s3 + $0x50] sm:$0xf]
        %v812 = vld [vmem:[%s3 + $0x54] sm:$0xf]
        %v813 = vld [vmem:[%s3 + $0x58] sm:$0xf]
        %v814 = vld [vmem:[%s3 + $0x5c] sm:$0xf]
        %v815 = vld [vmem:[%s3 + $0x60] sm:$0xf]
        %v816 = vld [vmem:[%s3 + $0x64] sm:$0xf]
        %v817 = vld [vmem:[%s3 + $0x68] sm:$0xf]
        %v818 = vld [vmem:[%s3 + $0x6c] sm:$0xf]
        %v819 = vld [vmem:[%s3 + $0x70] sm:$0xf]
        %v820 = vld [vmem:[%s3 + $0x74] sm:$0xf]
        %v821 = vld [vmem:[%s3 + $0x78] sm:$0xf]
        %v822 = vld [vmem:[%s3 + $0x7c] sm:$0xf]
        %v823 = vld [vmem:[%s3 + $0x80] sm:$0xf]
        %v824 = vld [vmem:[%s3 + $0x84] sm:$0xf]
        %v825 = vld [vmem:[%s3 + $0x88] sm:$0xf]
        %v826 = vld [vmem:[%s3 + $0x8c] sm:$0xf]
        %v827 = vld [vmem:[%s3 + $0x90] sm:$0xf]
        %v828 = vld [vmem:[%s3 + $0x94] sm:$0xf]
        %v829 = vld [vmem:[%s3 + $0x98] sm:$0xf]
        %v830 = vld [vmem:[%s3 + $0x9c] sm:$0xf]
        %v831 = vld [vmem:[%s3 + $0xa0] sm:$0xf]
        %v832 = vld [vmem:[%s3 + $0xa4] sm:$0xf]
        %v833 = vld [vmem:[%s3 + $0xa8] sm:$0xf]
        %v834 = vld [vmem:[%s3 + $0xac] sm:$0xf]
        %v835 = vld [vmem:[%s3 + $0xb0] sm:$0xf]
        %v836 = vld [vmem:[%s3 + $0xb4] sm:$0xf]
        %v837 = vld [vmem:[%s3 + $0xb8] sm:$0xf]
        %v838 = vld [vmem:[%s3 + $0xbc] sm:$0xf]
        %v887 = vunpack.c.l.b16 %v791
        %v888 = vunpack.c.l.b16 %v792
        %v889 = vunpack.c.l.b16 %v793
        %v890 = vunpack.c.l.b16 %v794
        %v891 = vunpack.c.l.b16 %v795
        %v892 = vunpack.c.l.b16 %v796
        %v893 = vunpack.c.l.b16 %v797
        %v894 = vunpack.c.l.b16 %v798
        %v895 = vunpack.c.l.b16 %v799
        %v896 = vunpack.c.l.b16 %v800
        %v897 = vunpack.c.l.b16 %v801
        %v898 = vunpack.c.l.b16 %v802
        %v899 = vunpack.c.l.b16 %v803
        %v900 = vunpack.c.l.b16 %v804
        %v901 = vunpack.c.l.b16 %v805
        %v902 = vunpack.c.l.b16 %v806
        %v903 = vunpack.c.l.b16 %v807
        %v904 = vunpack.c.l.b16 %v808
        %v905 = vunpack.c.l.b16 %v809
        %v906 = vunpack.c.l.b16 %v810
        %v907 = vunpack.c.l.b16 %v811
        %v908 = vunpack.c.l.b16 %v812
        %v909 = vunpack.c.l.b16 %v813
        %v910 = vunpack.c.l.b16 %v814
        %v911 = vunpack.c.l.b16 %v815
        %v912 = vunpack.c.l.b16 %v816
        %v913 = vunpack.c.l.b16 %v817
        %v914 = vunpack.c.l.b16 %v818
        %v915 = vunpack.c.l.b16 %v819
        %v916 = vunpack.c.l.b16 %v820
        %v917 = vunpack.c.l.b16 %v821
        %v918 = vunpack.c.l.b16 %v822
        %v919 = vunpack.c.l.b16 %v823
        %v920 = vunpack.c.l.b16 %v824
        %v921 = vunpack.c.l.b16 %v825
        %v922 = vunpack.c.l.b16 %v826
        %v923 = vunpack.c.l.b16 %v827
        %v924 = vunpack.c.l.b16 %v828
        %v925 = vunpack.c.l.b16 %v829
        %v926 = vunpack.c.l.b16 %v830
        %v927 = vunpack.c.l.b16 %v831
        %v928 = vunpack.c.l.b16 %v832
        %v929 = vunpack.c.l.b16 %v833
        %v930 = vunpack.c.l.b16 %v834
        %v931 = vunpack.c.l.b16 %v835
        %v932 = vunpack.c.l.b16 %v836
        %v933 = vunpack.c.l.b16 %v837
        %v934 = vunpack.c.l.b16 %v838
        %v935 = vpack.c.b16 %v888, %v887
        %v936 = vpack.c.b16 %v890, %v889
        %v937 = vpack.c.b16 %v892, %v891
        %v938 = vpack.c.b16 %v894, %v893
        %v939 = vpack.c.b16 %v896, %v895
        %v940 = vpack.c.b16 %v898, %v897
        %v941 = vpack.c.b16 %v900, %v899
        %v942 = vpack.c.b16 %v902, %v901
        %v943 = vpack.c.b16 %v904, %v903
        %v944 = vpack.c.b16 %v906, %v905
        %v945 = vpack.c.b16 %v908, %v907
        %v946 = vpack.c.b16 %v910, %v909
        %v947 = vpack.c.b16 %v912, %v911
        %v948 = vpack.c.b16 %v914, %v913
        %v949 = vpack.c.b16 %v916, %v915
        %v950 = vpack.c.b16 %v918, %v917
        %v951 = vpack.c.b16 %v920, %v919
        %v952 = vpack.c.b16 %v922, %v921
        %v953 = vpack.c.b16 %v924, %v923
        %v954 = vpack.c.b16 %v926, %v925
        %v955 = vpack.c.b16 %v928, %v927
        %v956 = vpack.c.b16 %v930, %v929
        %v957 = vpack.c.b16 %v932, %v931
        %v958 = vpack.c.b16 %v934, %v933
        %983 = vmatprep.subr.bf16.mxu0 0
        %984 = vmatpush1.bf16.msra.mxu0 %v942
        %985 = vmatprep.subr.bf16.mxu0 0
        %986 = vmatpush1.bf16.msra.mxu0 %v941
        %987 = vmatprep.subr.bf16.mxu0 0
        %988 = vmatpush1.bf16.msra.mxu0 %v940
        %989 = vmatprep.subr.bf16.mxu0 0
        %990 = vmatpush1.bf16.msra.mxu0 %v939
        %991 = vmatprep.subr.bf16.mxu0 0
        %992 = vmatpush1.bf16.msra.mxu0 %v938
        %993 = vmatprep.subr.bf16.mxu0 0
        %994 = vmatpush1.bf16.msra.mxu0 %v937
        %995 = vmatprep.subr.bf16.mxu0 0
        %996 = vmatpush1.bf16.msra.mxu0 %v936
        %997 = vmatprep.subr.bf16.mxu0 0
        %998 = vmatpush1.bf16.msra.mxu0 %v935
        %999 = vmatprep.subr.bf16.mxu0 0
        %1000 = vmatpush2.bf16.msra.mxu0 %v950
        %1001 = vmatprep.subr.bf16.mxu0 0
        %1002 = vmatpush2.bf16.msra.mxu0 %v949
        %1003 = vmatprep.subr.bf16.mxu0 0
        %1004 = vmatpush2.bf16.msra.mxu0 %v948
        %1005 = vmatprep.subr.bf16.mxu0 0
        %1006 = vmatpush2.bf16.msra.mxu0 %v947
        %1007 = vmatprep.subr.bf16.mxu0 0
        %1008 = vmatpush2.bf16.msra.mxu0 %v946
        %1009 = vmatprep.subr.bf16.mxu0 0
        %1010 = vmatpush2.bf16.msra.mxu0 %v945
        %1011 = vmatprep.subr.bf16.mxu0 0
        %1012 = vmatpush2.bf16.msra.mxu0 %v944
        %1013 = vmatprep.subr.bf16.mxu0 0
        %1014 = vmatpush2.bf16.msra.mxu0 %v943
        %1015 = vmatprep.mubr.bf16.mxu0 %v245
        %1016 = vmatmul.mubr.bf16.gmra.mxu0 %v244
        %v1017 = vpop.f32.mrf.mxu0
        %v1018 = vadd.f32 0.0, %v1017
        %v1019 = vpop.f32.mrf.mxu0
        %v1020 = vpop.f32.mrf.mxu0
        %v1021 = vpop.f32.mrf.mxu0
        %1022 = vdwg.mxu0
        %1023 = vmatprep.subr.bf16.mxu0 0
        %1024 = vmatpush1.bf16.msra.mxu0 %v958
        %1025 = vmatprep.subr.bf16.mxu0 0
        %1026 = vmatpush1.bf16.msra.mxu0 %v957
        %1027 = vmatprep.subr.bf16.mxu0 0
        %1028 = vmatpush1.bf16.msra.mxu0 %v956
        %1029 = vmatprep.subr.bf16.mxu0 0
        %1030 = vmatpush1.bf16.msra.mxu0 %v955
        %1031 = vmatprep.subr.bf16.mxu0 0
        %1032 = vmatpush1.bf16.msra.mxu0 %v954
        %1033 = vmatprep.subr.bf16.mxu0 0
        %1034 = vmatpush1.bf16.msra.mxu0 %v953
        %1035 = vmatprep.subr.bf16.mxu0 0
        %1036 = vmatpush1.bf16.msra.mxu0 %v952
        %1037 = vmatprep.subr.bf16.mxu0 0
        %1038 = vmatpush1.bf16.msra.mxu0 %v951
        %1039 = vmatprep.subr.bf16.mxu0 0
        %1040 = vmatpush2.bf16.msra.mxu0 0
        %1041 = vmatprep.subr.bf16.mxu0 0
        %1042 = vmatpush2.bf16.msra.mxu0 0
        %1043 = vmatprep.subr.bf16.mxu0 0
        %1044 = vmatpush2.bf16.msra.mxu0 0
        %1045 = vmatprep.subr.bf16.mxu0 0
        %1046 = vmatpush2.bf16.msra.mxu0 0
        %1047 = vmatprep.subr.bf16.mxu0 0
        %1048 = vmatpush2.bf16.msra.mxu0 0
        %1049 = vmatprep.subr.bf16.mxu0 0
        %1050 = vmatpush2.bf16.msra.mxu0 0
        %1051 = vmatprep.subr.bf16.mxu0 0
        %1052 = vmatpush2.bf16.msra.mxu0 0
        %1053 = vmatprep.subr.bf16.mxu0 0
        %1054 = vmatpush2.bf16.msra.mxu0 0
        %1055 = vmatprep.mubr.bf16.mxu0 0
        %1056 = vmatmul.mubr.bf16.gmra.mxu0 %v246
        %v1057 = vpop.f32.mrf.mxu0
        %v1058 = vadd.f32 %v1018, %v1057
        %v1059 = vpop.f32.mrf.mxu0
        %v1060 = vpop.f32.mrf.mxu0
        %v1061 = vpop.f32.mrf.mxu0
        %1062 = vdwg.mxu0
        %v1063 = vpack.c.bf16 %v786, %v786
        %v1064 = vpack.c.bf16 %v514, %v514
        %vm1065 = vcmask 523264
        %v1067 = vsel %vm1065, %v1063, 0
        %v1070 = vsel %vm1065, %v1064, 0
        %1072 = vmatprep.subr.bf16.mxu0 0
        %1073 = vmatpush1.bf16.xpose.msra.mxu0 0
        %1074 = vmatprep.subr.bf16.mxu0 0
        %1075 = vmatpush1.bf16.xpose.msra.mxu0 0
        %1076 = vmatprep.subr.bf16.mxu0 0
        %1077 = vmatpush1.bf16.xpose.msra.mxu0 0
        %1078 = vmatprep.subr.bf16.mxu0 0
        %1079 = vmatpush1.bf16.xpose.msra.mxu0 0
        %1080 = vmatprep.subr.bf16.mxu0 0
        %1081 = vmatpush1.bf16.xpose.msra.mxu0 0
        %1082 = vmatprep.subr.bf16.mxu0 0
        %1083 = vmatpush1.bf16.xpose.msra.mxu0 0
        %1084 = vmatprep.subr.bf16.mxu0 0
        %1085 = vmatpush1.bf16.xpose.msra.mxu0 0
        %1086 = vmatprep.subr.bf16.mxu0 0
        %1087 = vmatpush1.bf16.xpose.msra.mxu0 %v1070
        %1088 = vmatprep.subr.bf16.mxu0 0
        %1089 = vmatpush2.bf16.xpose.msra.mxu0 0
        %1090 = vmatprep.subr.bf16.mxu0 0
        %1091 = vmatpush2.bf16.xpose.msra.mxu0 0
        %1092 = vmatprep.subr.bf16.mxu0 0
        %1093 = vmatpush2.bf16.xpose.msra.mxu0 0
        %1094 = vmatprep.subr.bf16.mxu0 0
        %1095 = vmatpush2.bf16.xpose.msra.mxu0 0
        %1096 = vmatprep.subr.bf16.mxu0 0
        %1097 = vmatpush2.bf16.xpose.msra.mxu0 0
        %1098 = vmatprep.subr.bf16.mxu0 0
        %1099 = vmatpush2.bf16.xpose.msra.mxu0 0
        %1100 = vmatprep.subr.bf16.mxu0 0
        %1101 = vmatpush2.bf16.xpose.msra.mxu0 0
        %1102 = vmatprep.subr.bf16.mxu0 0
        %1103 = vmatpush2.bf16.xpose.msra.mxu0 0
        %1104 = vmatprep.mubr.bf16.mxu0 0
        %1105 = vmatmul.mubr.bf16.gmra.mxu0 %v1067
        %v1106 = vpop.f32.mrf.mxu0
        %v1107 = vadd.f32 0.0, %v1106
        %v1108 = vpop.f32.mrf.mxu0
        %v1109 = vpop.f32.mrf.mxu0
        %v1110 = vpop.f32.mrf.mxu0
        %1111 = vdwg.mxu0
        %v1112 = vmul.f32 %v1107, 0.05103104
        %v1113 = vlaneseq
        %v1114 = vshrl.u32 %v1113, 7
        %v1115 = vlaneseq
        %v1116 = vand.u32 %v1115, 127
        %vm1117 = vcmp.ge.s32.totalorder %v1114, %v1116
        %v1118 = vsel %vm1117, %v1112, -inf
        %vm1119 = vcmask 64512
        %v1120 = vsel %vm1119, %v1118, -inf
        %1121 = vmax.xlane.f32.xlu0 %v1120
        %v1122 = vpop.xlane.xlu0 %1121
        %v1123 = vsub.f32 %v1118, %v1122
        %v1124 = vmul.f32 %v1123, 1.442695
        %v1125 = vpow.pop %v1124
        %v1126 = vsel %vm1119, %v1125, 0.0
        %1127 = vadd.xlane.f32.xlu0 %v1126
        %v1128 = vpop.xlane.xlu0 %1127
        %v1129 = vrcp.pop %v1128
        %v1130 = vmul.f32 %v1125, %v1129
        %v1131 = vld [vmem:[%s239] sm:$0xff]
        %vm1132 = vcmp.ge.f32.partialorder %v1131, 0.2
        %v1133 = vmul.f32 %v1130, 1.25
        %v1134 = vsel %vm1132, %v1133, 0.0
        %v1135 = vpack.c.bf16 %v1134, %v1134
        %v1136 = vpack.c.bf16 %v1058, %v1058
        %v1138 = vsel %vm1119, %v1135, 0
        %vm1140 = vcmask 1043456
        %v1142 = vsel %vm1140, %v1136, 0
        %1144 = vmatprep.subr.bf16.mxu0 0
        %1145 = vmatpush1.bf16.msra.mxu0 0
        %1146 = vmatprep.subr.bf16.mxu0 0
        %1147 = vmatpush1.bf16.msra.mxu0 0
        %1148 = vmatprep.subr.bf16.mxu0 0
        %1149 = vmatpush1.bf16.msra.mxu0 0
        %1150 = vmatprep.subr.bf16.mxu0 0
        %1151 = vmatpush1.bf16.msra.mxu0 0
        %1152 = vmatprep.subr.bf16.mxu0 0
        %1153 = vmatpush1.bf16.msra.mxu0 0
        %1154 = vmatprep.subr.bf16.mxu0 0
        %1155 = vmatpush1.bf16.msra.mxu0 0
        %1156 = vmatprep.subr.bf16.mxu0 0
        %1157 = vmatpush1.bf16.msra.mxu0 0
        %1158 = vmatprep.subr.bf16.mxu0 0
        %1159 = vmatpush1.bf16.msra.mxu0 %v1142
        %1160 = vmatprep.subr.bf16.mxu0 0
        %1161 = vmatpush2.bf16.msra.mxu0 0
        %1162 = vmatprep.subr.bf16.mxu0 0
        %1163 = vmatpush2.bf16.msra.mxu0 0
        %1164 = vmatprep.subr.bf16.mxu0 0
        %1165 = vmatpush2.bf16.msra.mxu0 0
        %1166 = vmatprep.subr.bf16.mxu0 0
        %1167 = vmatpush2.bf16.msra.mxu0 0
        %1168 = vmatprep.subr.bf16.mxu0 0
        %1169 = vmatpush2.bf16.msra.mxu0 0
        %1170 = vmatprep.subr.bf16.mxu0 0
        %1171 = vmatpush2.bf16.msra.mxu0 0
        %1172 = vmatprep.subr.bf16.mxu0 0
        %1173 = vmatpush2.bf16.msra.mxu0 0
        %1174 = vmatprep.subr.bf16.mxu0 0
        %1175 = vmatpush2.bf16.msra.mxu0 0
        %1176 = vmatprep.mubr.bf16.mxu0 0
        %1177 = vmatmul.mubr.bf16.gmra.mxu0 %v1138
        %v1178 = vpop.f32.mrf.mxu0
        %v1179 = vadd.f32 0.0, %v1178
        %v1180 = vpop.f32.mrf.mxu0
        %v1181 = vpop.f32.mrf.mxu0
        %v1182 = vpop.f32.mrf.mxu0
        %1183 = vdwg.mxu0
        %1184 = vst.msk [vmem:[%s230] sm:$0xff] %vm1065, %v1179
        %s1185 = sand.u32 %s142, 1
        %s1186 = scalar_lea.sflag [#allocation3], %s1185
        %s1187 = sand.u32 %s142, 1
        %s1188 = smul.addr %s1187, 8
        %s1189 = scalar_lea.vmem [#allocation2], %s1188
        // Predicated region
        $region41: #{tpu_custom_call.1} parent=39 // pred_check
          %p1190 = pneg %p152
        $region42: #{tpu_custom_call.1} parent=39 // pred_check_branch
          %1192 = sbr.rel (%p1190) target = $region44
        $region43: #{tpu_custom_call.1} parent=39 // pred_region
          %s1194 = ssub.s32 128, 128
          %1195 = vsyncadd %s1186, %s1194
          %s1196 = smul.addr %s19, 128
          %s1197 = scalar_lea.hbm %s5, %s1196
          %s1199 = sshll.u32 %s1189, 4
          %s1200 = int_to_ptr.vmem [resolvable:$true] %s1199
          %1202 = dma.vmem_to_hbm [thread:$0]  %s1200, 128, %s1197, %s1186
        $region44: #{tpu_custom_call.1} parent=39 // pred_fallthru
          _
      $region40: #{tpu_custom_call.1} parent=5 // pred_fallthru
        _
      %p1203 = scmp.le.s32.totalorder 2, %s14
      // Predicated region
      $region45: #{tpu_custom_call.1} parent=5 // pred_check
        %p1204 = pneg %p1203
      $region46: #{tpu_custom_call.1} parent=5 // pred_check_branch
        %1206 = sbr.rel (%p1204) target = $region48
      $region47: #{tpu_custom_call.1} parent=5 // pred_region
        %s1207 = ssub.s32 %s14, 2
        // Predicated region
        $region49: #{tpu_custom_call.1} parent=47 // pred_check
          %p1208 = pneg %p158
        $region50: #{tpu_custom_call.1} parent=47 // pred_check_branch
          %1210 = sbr.rel (%p1208) target = $region52
        $region51: #{tpu_custom_call.1} parent=47 // pred_region
          %s1211 = sand.u32 %s143, 1
          %s1212 = scalar_lea.sflag [#allocation3], %s1211
          %s1213 = sand.u32 %s143, 1
          %s1214 = smul.addr %s1213, 8
          %s1215 = scalar_lea.vmem [#allocation2], %s1214
          %1216 = dma.done %s1212, 128
        $region52: #{tpu_custom_call.1} parent=47 // pred_fallthru
          _
      $region48: #{tpu_custom_call.1} parent=5 // pred_fallthru
        _
    $region6: #{tpu_custom_call.1} parent=1 // loop_footer
      %s18 = sadd.s32 1, %s14
    $region7: #{tpu_custom_call.1} parent=1 // loop_footer_branch
      %13 = sbr.rel target = $region3
    $region8: #{tpu_custom_call.1} parent=1 // loop_exit
      _
    %1217 = vsyncpa [#allocation3], 1
    %s1218 = scalar_lea.sflag [#allocation3], 1
    %1219 = vsyncpa %s1218, 1

</llo_original>
